<compile_context>
chip_gen: v6e
topology: v6e:2x2x1
jax: 0.10.0
libtpu: 0.0.40
codegen_flags: <defaults>
</compile_context>

<pallas_src>
import jax
import jax.numpy as jnp
from jax.experimental import pallas as pl
from jax.experimental.pallas import tpu as pltpu


def _multicat_kernel(logits_ref, gumbel_ref, samples_ref, neglogp_ref):
    # logits_ref: VMEM [TB, G, K] (any float dtype)   gumbel_ref: VMEM [TB, G, K] f32
    # samples_ref: VMEM [TB, G] int32                 neglogp_ref: VMEM [TB, 1] f32
    logits = logits_ref[...].astype(jnp.float32)                       # [TB, G, K]
    tb, g, k = logits.shape

    # --- Gumbel-max sampling: argmax over the category (lane) axis ----------
    z = logits + gumbel_ref[...]                                        # [TB, G, K]
    zmax = jnp.max(z, axis=-1, keepdims=True)                           # [TB, G, 1]
    hit = z >= zmax                                                     # [TB, G, K]
    cat_idx = jax.lax.broadcasted_iota(jnp.int32, (tb, g, k), 2)
    sample = jnp.min(jnp.where(hit, cat_idx, k), axis=-1)               # [TB, G] (first max)

    # --- log_prob(sample) = logits[sample] - logsumexp(logits) --------------
    # Reuse the argmax mask to gather the selected logit (no one-hot recompute).
    selected = jnp.max(jnp.where(hit, logits, -jnp.inf), axis=-1)       # [TB, G]
    m = jnp.max(logits, axis=-1, keepdims=True)                         # [TB, G, 1]
    lse = m[..., 0] + jnp.log(jnp.sum(jnp.exp(logits - m), axis=-1))    # [TB, G]
    logp = selected - lse                                               # [TB, G]

    samples_ref[...] = sample.astype(jnp.int32)
    neglogp_ref[...] = -jnp.sum(logp, axis=-1, keepdims=True)           # [TB, 1]


def _round_up(x, m):
    return ((x + m - 1) // m) * m


def _multicat_pallas(logits, gumbel, block_b):
    bp, g, k = logits.shape
    grid = (bp // block_b,)

    # Advisory cost hint: EUP-heavy custom call (exp per element + log per (b, g)).
    cost = pl.CostEstimate(
        flops=10 * bp * g * k,
        transcendentals=bp * g * (k + 1),
        bytes_accessed=bp * g * k * (logits.dtype.itemsize + 4) + bp * g * 4 + bp * 4,
    )

    return pl.pallas_call(
        _multicat_kernel,
        out_shape=(
            jax.ShapeDtypeStruct((bp, g), jnp.int32),
            jax.ShapeDtypeStruct((bp, 1), jnp.float32),
        ),
        grid_spec=pltpu.PrefetchScalarGridSpec(
            num_scalar_prefetch=0,
            grid=grid,
            in_specs=[
                pl.BlockSpec((block_b, g, k), lambda i: (i, 0, 0)),
                pl.BlockSpec((block_b, g, k), lambda i: (i, 0, 0)),
            ],
            out_specs=(
                pl.BlockSpec((block_b, g), lambda i: (i, 0)),
                pl.BlockSpec((block_b, 1), lambda i: (i, 0)),
            ),
        ),
        compiler_params=pltpu.CompilerParams(
            dimension_semantics=("parallel",),   # batch tiles are independent (2 TCs on v7x)
        ),
        cost_estimate=cost,
    )(logits, gumbel)


def multi_categorical_forward(logits, key, *, block_b=None):
    """logits: [B, G, K] float.  Returns (samples [B, G] int32, neg_log_prob [B] f32)."""
    b, g, k = logits.shape

    if block_b is None:
        # Target ~2 MiB of input (logits + gumbel) per block: big enough to amortize
        # per-step overhead and hide HBM reads, small enough (x ~5 live temporaries
        # + 2x double buffering) to stay well inside v7x's 32 MiB scoped VMEM.
        row_bytes = g * k * (logits.dtype.itemsize + 4)
        block_b = max(8, min(1024, (2 * 1024 * 1024) // max(row_bytes, 1)))
    block_b = max(8, (block_b // 8) * 8)          # sublane-aligned batch tile
    block_b = min(block_b, _round_up(b, 8))

    bp = _round_up(b, block_b)
    if bp != b:
        logits = jnp.pad(logits, ((0, bp - b), (0, 0), (0, 0)))

    # Gumbel noise drawn outside the kernel (no TPU-hardware-PRNG primitive needed).
    gumbel = jax.random.gumbel(key, (bp, g, k), dtype=jnp.float32)

    samples, neglogp = _multicat_pallas(logits, gumbel, block_b)
    return samples[:b], neglogp[:b, 0]


if __name__ == "__main__":
    # Small demo: batch=32, 8 categorical groups, 128 categories. block_b=8 forces a
    # 4-step pipelined grid so the tiled path is actually exercised.
    B, G, K = 32, 8, 128
    key = jax.random.PRNGKey(0)
    k_logits, k_sample = jax.random.split(key)
    logits = jax.random.normal(k_logits, (B, G, K), dtype=jnp.float32)

    samples, neg_logp = multi_categorical_forward(logits, k_sample, block_b=8)
    samples = jax.block_until_ready(samples)
    neg_logp = jax.block_until_ready(neg_logp)

    assert samples.shape == (B, G) and samples.dtype == jnp.int32
    assert neg_logp.shape == (B,) and neg_logp.dtype == jnp.float32
    assert bool(jnp.all((samples >= 0) & (samples < K)))
    assert bool(jnp.all(jnp.isfinite(neg_logp)))
    assert bool(jnp.all(neg_logp >= 0.0))

    # Reference check with the same Gumbel noise the wrapper drew (B % block_b == 0,
    # so no padding and the noise shapes match exactly).
    gumbel = jax.random.gumbel(k_sample, (B, G, K), dtype=jnp.float32)
    ref_samples = jnp.argmax(logits + gumbel, axis=-1).astype(jnp.int32)
    logp_all = jax.nn.log_softmax(logits, axis=-1)
    ref_logp = jnp.take_along_axis(logp_all, ref_samples[..., None], axis=-1)[..., 0]
    ref_neg_logp = -jnp.sum(ref_logp, axis=-1)

    assert bool(jnp.all(samples == ref_samples)), "sample mismatch vs Gumbel-max reference"
    assert bool(jnp.allclose(neg_logp, ref_neg_logp, rtol=1e-3, atol=1e-2)), "neg_log_prob mismatch"

    print("KERNEL_OK")
</pallas_src>

<mosaic_0001>
module attributes {stable_mosaic.version = 11 : i64} {
  func.func @_multicat_kernel(%arg0: i32, %arg1: memref<8x8x128xf32, #tpu.memory_space<vmem>>, %arg2: memref<8x8x128xf32, #tpu.memory_space<vmem>>, %arg3: memref<8x8xi32, #tpu.memory_space<vmem>>, %arg4: memref<8x1xf32, #tpu.memory_space<vmem>>) attributes {dimension_semantics = [#tpu.dimension_semantics<parallel>], iteration_bounds = array<i64: 4>, scalar_prefetch = 0 : i64, scratch_operands = 0 : i64, tpu.core_type = #tpu.core_type<tc>, window_params = [{transform_indices = @transform_0, window_bounds = array<i64: 8, 8, 128>}, {transform_indices = @transform_1, window_bounds = array<i64: 8, 8, 128>}, {transform_indices = @transform_2, window_bounds = array<i64: 8, 8>}, {transform_indices = @transform_3, window_bounds = array<i64: 8, 1>}]} {
    %c0 = arith.constant 0 : index
    %c0_0 = arith.constant 0 : index
    %c0_1 = arith.constant 0 : index
    %0 = vector.load %arg1[%c0, %c0_0, %c0_1] : memref<8x8x128xf32, #tpu.memory_space<vmem>>, vector<8x8x128xf32>
    %c0_2 = arith.constant 0 : index
    %c0_3 = arith.constant 0 : index
    %c0_4 = arith.constant 0 : index
    %1 = vector.load %arg2[%c0_2, %c0_3, %c0_4] : memref<8x8x128xf32, #tpu.memory_space<vmem>>, vector<8x8x128xf32>
    %2 = arith.addf %0, %1 : vector<8x8x128xf32>
    %cst = arith.constant dense<0xFF800000> : vector<8x8xf32>
    %3 = vector.multi_reduction <maximumf>, %2, %cst [2] : vector<8x8x128xf32> to vector<8x8xf32>
    %4 = vector.shape_cast %3 : vector<8x8xf32> to vector<8x8x1xf32>
    %5 = vector.broadcast %4 : vector<8x8x1xf32> to vector<8x8x128xf32>
    %6 = arith.cmpf oge, %2, %5 : vector<8x8x128xf32>
    %7 = tpu.iota {dimensions = array<i32: 2>} : vector<8x8x128xi32>
    %c128_i32 = arith.constant 128 : i32
    %8 = vector.broadcast %c128_i32 : i32 to vector<8x8x128xi32>
    %9 = arith.select %6, %7, %8 : vector<8x8x128xi1>, vector<8x8x128xi32>
    %cst_5 = arith.constant dense<2147483647> : vector<8x8xi32>
    %10 = vector.multi_reduction <minsi>, %9, %cst_5 [2] : vector<8x8x128xi32> to vector<8x8xi32>
    %cst_6 = arith.constant 0xFF800000 : f32
    %11 = vector.broadcast %cst_6 : f32 to vector<8x8x128xf32>
    %12 = arith.select %6, %0, %11 : vector<8x8x128xi1>, vector<8x8x128xf32>
    %cst_7 = arith.constant dense<0xFF800000> : vector<8x8xf32>
    %13 = vector.multi_reduction <maximumf>, %12, %cst_7 [2] : vector<8x8x128xf32> to vector<8x8xf32>
    %cst_8 = arith.constant dense<0xFF800000> : vector<8x8xf32>
    %14 = vector.multi_reduction <maximumf>, %0, %cst_8 [2] : vector<8x8x128xf32> to vector<8x8xf32>
    %15 = vector.shape_cast %14 : vector<8x8xf32> to vector<8x8x1xf32>
    %16 = vector.shape_cast %15 : vector<8x8x1xf32> to vector<8x8xf32>
    %17 = vector.broadcast %15 : vector<8x8x1xf32> to vector<8x8x128xf32>
    %18 = arith.subf %0, %17 : vector<8x8x128xf32>
    %19 = math.exp %18 : vector<8x8x128xf32>
    %cst_9 = arith.constant dense<0.000000e+00> : vector<8x8xf32>
    %20 = vector.multi_reduction <add>, %19, %cst_9 [2] : vector<8x8x128xf32> to vector<8x8xf32>
    %21 = math.log %20 : vector<8x8xf32>
    %22 = arith.addf %16, %21 : vector<8x8xf32>
    %23 = arith.subf %13, %22 : vector<8x8xf32>
    %c0_10 = arith.constant 0 : index
    %c0_11 = arith.constant 0 : index
    %24 = vector.load %arg3[%c0_10, %c0_11] : memref<8x8xi32, #tpu.memory_space<vmem>>, vector<8x8xi32>
    tpu.vector_store %arg3[%c0_10, %c0_11], %10 {strides = array<i32>} : memref<8x8xi32, #tpu.memory_space<vmem>>, vector<8x8xi32>,
    %cst_12 = arith.constant dense<0.000000e+00> : vector<8xf32>
    %25 = vector.multi_reduction <add>, %23, %cst_12 [1] : vector<8x8xf32> to vector<8xf32>
    %26 = vector.shape_cast %25 : vector<8xf32> to vector<8x1xf32>
    %cst_13 = arith.constant 0.000000e+00 : f32
    %27 = vector.broadcast %cst_13 : f32 to vector<8x1xf32>
    %28 = arith.subf %27, %26 : vector<8x1xf32>
    %c0_14 = arith.constant 0 : index
    %c0_15 = arith.constant 0 : index
    %29 = vector.load %arg4[%c0_14, %c0_15] : memref<8x1xf32, #tpu.memory_space<vmem>>, vector<8x1xf32>
    tpu.vector_store %arg4[%c0_14, %c0_15], %28 {strides = array<i32>} : memref<8x1xf32, #tpu.memory_space<vmem>>, vector<8x1xf32>,
    return
  }
  func.func @transform_0(%arg0: i32) -> (i32, i32, i32) {
    %c0_i32 = arith.constant 0 : i32
    %c0_i32_0 = arith.constant 0 : i32
    %c0_i32_1 = arith.constant 0 : i32
    return %arg0, %c0_i32, %c0_i32_0 : i32, i32, i32
  }
  func.func @transform_1(%arg0: i32) -> (i32, i32, i32) {
    %c0_i32 = arith.constant 0 : i32
    %c0_i32_0 = arith.constant 0 : i32
    %c0_i32_1 = arith.constant 0 : i32
    return %arg0, %c0_i32, %c0_i32_0 : i32, i32, i32
  }
  func.func @transform_2(%arg0: i32) -> (i32, i32) {
    %c0_i32 = arith.constant 0 : i32
    %c0_i32_0 = arith.constant 0 : i32
    return %arg0, %c0_i32 : i32, i32
  }
  func.func @transform_3(%arg0: i32) -> (i32, i32) {
    %c0_i32 = arith.constant 0 : i32
    %c0_i32_0 = arith.constant 0 : i32
    return %arg0, %c0_i32 : i32, i32
  }
}

</mosaic_0001>

<llo_original>
// kernel: tpu_custom_call.1
$region0: #{tpu_custom_call.1}
  #allocation0 [shape = 'u32[]', space=smem, size = 0x4, offset = 0x4, fixed_abs, tag = 'smem constant byte address 0x4 - core index']
  #allocation1 [shape = 'u32[144,128]{1,0:T(1,128)}', space=vmem, size = 0x12000, scoped, tag = 'internal scratch']
  %s0 = inlined_call_operand.hbm [shape: f32[32,8,128], index: 0, kind: input, shape index: {}]
  %s1 = inlined_call_operand.hbm [shape: f32[32,8,128], index: 1, kind: input, shape index: {}]
  %s2 = inlined_call_operand.vmem [shape: s32[32,8], index: 2, kind: output, shape index: {0}]
  %s3 = inlined_call_operand.vmem [shape: f32[32,1], index: 3, kind: output, shape index: {1}]
  %4 = xla_tuple %s2, %s3
  %s5 = sld [smem:[#allocation0]]
  $region57: #{tpu_custom_call.1} parent=0
    _
  %s7 = ssub.s32 1, %s5
  %s8 = scalar_select 0, %s7, %s5
  $region1: #{tpu_custom_call.1} parent=0
    #allocation2 [shape = 'u8[65536]{0}', space=vmem, size = 0x10000, scoped, tag = 'input window, operand 0']
    #allocation3 [shape = 's32[2]{0}', space=sflag, size = 0x8, scoped, tag = 'scoped memory for tpu_custom_call.1']
    #allocation4 [shape = 'u8[65536]{0}', space=vmem, size = 0x10000, scoped, tag = 'input window, operand 1']
    #allocation5 [shape = 's32[2]{0}', space=sflag, size = 0x8, scoped, tag = 'scoped memory for tpu_custom_call.1']
    %9 = vsyncpa [#allocation3], 0
    %s10 = scalar_lea.sflag [#allocation3], 1
    %11 = vsyncpa %s10, 0
    %12 = vsyncpa [#allocation5], 0
    %s13 = scalar_lea.sflag [#allocation5], 1
    %14 = vsyncpa %s13, 0
    loop: start=0, step=1, limit=6
    $region2: #{tpu_custom_call.1} parent=1 // loop_pre_header
      _
    $region3: #{tpu_custom_call.1} parent=1 // loop_header
      %s16 = sphi 0, %s20
      %p17 = scmp.ge.s32.totalorder %s16, 6
      %s26 = sphi 0, %s28
      %s29 = sphi 0, %s26
      %s30 = sphi 0, %s29
      %s46 = sphi 0, %s30
      %s52 = sphi 0, %s54
      %s55 = sphi 0, %s52
      %s56 = sphi 0, %s55
      %s72 = sphi 0, %s56
      %s78 = sphi 0, %s80
      %s81 = sphi 0, %s78
      %s82 = sphi 0, %s81
      %s98 = sphi 0, %s82
      %s104 = sphi 0, %s106
      %s107 = sphi 0, %s104
      %s108 = sphi 0, %s107
      %s124 = sphi 0, %s108
    $region4: #{tpu_custom_call.1} parent=1 // loop_header_branch
      %19 = sbr.rel (%p17) target = $region8
    $region5: #{tpu_custom_call.1} parent=1 // loop_body
      %s21 = ssub.s32 %s16, 1
      %s22 = ssub.s32 %s16, 2
      %s23 = sadd.s32 %s16, 1
      %s24 = ssub.s32 %s16, %s23
      %p25 = scmp.eq.s32.totalorder %s24, 0
      %s27 = sadd.s32 %s26, 1
      %s28 = scalar_select %p25, %s26, %s27
      %p31 = pneg %p25
      %p32 = scmp.eq.s32.totalorder %s16, 3
      %p33 = por %p31, %p32
      %p34 = scmp.ne.s32.totalorder %s26, %s29
      %p35 = scmp.eq.s32.totalorder %s16, 0
      %p36 = por %p34, %p35
      %p37 = scmp.ne.s32.totalorder %s26, %s29
      %p38 = scmp.eq.s32.totalorder %s21, 3
      %p39 = por %p37, %p38
      %p40 = scmp.ne.s32.totalorder %s29, %s30
      %p41 = scmp.eq.s32.totalorder %s21, 0
      %p42 = por %p40, %p41
      %p43 = scmp.ne.s32.totalorder %s29, %s30
      %p44 = scmp.eq.s32.totalorder %s22, 3
      %p45 = por %p43, %p44
      %p47 = scmp.ne.s32.totalorder %s30, %s46
      %p48 = scmp.eq.s32.totalorder %s22, 0
      %p49 = por %p47, %p48
      %s50 = ssub.s32 %s16, %s23
      %p51 = scmp.eq.s32.totalorder %s50, 0
      %s53 = sadd.s32 %s52, 1
      %s54 = scalar_select %p51, %s52, %s53
      %p57 = pneg %p51
      %p58 = scmp.eq.s32.totalorder %s16, 3
      %p59 = por %p57, %p58
      %p60 = scmp.ne.s32.totalorder %s52, %s55
      %p61 = scmp.eq.s32.totalorder %s16, 0
      %p62 = por %p60, %p61
      %p63 = scmp.ne.s32.totalorder %s52, %s55
      %p64 = scmp.eq.s32.totalorder %s21, 3
      %p65 = por %p63, %p64
      %p66 = scmp.ne.s32.totalorder %s55, %s56
      %p67 = scmp.eq.s32.totalorder %s21, 0
      %p68 = por %p66, %p67
      %p69 = scmp.ne.s32.totalorder %s55, %s56
      %p70 = scmp.eq.s32.totalorder %s22, 3
      %p71 = por %p69, %p70
      %p73 = scmp.ne.s32.totalorder %s56, %s72
      %p74 = scmp.eq.s32.totalorder %s22, 0
      %p75 = por %p73, %p74
      %s76 = ssub.s32 %s16, %s23
      %p77 = scmp.eq.s32.totalorder %s76, 0
      %s79 = sadd.s32 %s78, 1
      %s80 = scalar_select %p77, %s78, %s79
      %p83 = pneg %p77
      %p84 = scmp.eq.s32.totalorder %s16, 3
      %p85 = por %p83, %p84
      %p86 = scmp.ne.s32.totalorder %s78, %s81
      %p87 = scmp.eq.s32.totalorder %s16, 0
      %p88 = por %p86, %p87
      %p89 = scmp.ne.s32.totalorder %s78, %s81
      %p90 = scmp.eq.s32.totalorder %s21, 3
      %p91 = por %p89, %p90
      %p92 = scmp.ne.s32.totalorder %s81, %s82
      %p93 = scmp.eq.s32.totalorder %s21, 0
      %p94 = por %p92, %p93
      %p95 = scmp.ne.s32.totalorder %s81, %s82
      %p96 = scmp.eq.s32.totalorder %s22, 3
      %p97 = por %p95, %p96
      %p99 = scmp.ne.s32.totalorder %s82, %s98
      %p100 = scmp.eq.s32.totalorder %s22, 0
      %p101 = por %p99, %p100
      %s102 = ssub.s32 %s16, %s23
      %p103 = scmp.eq.s32.totalorder %s102, 0
      %s105 = sadd.s32 %s104, 1
      %s106 = scalar_select %p103, %s104, %s105
      %p109 = pneg %p103
      %p110 = scmp.eq.s32.totalorder %s16, 3
      %p111 = por %p109, %p110
      %p112 = scmp.ne.s32.totalorder %s104, %s107
      %p113 = scmp.eq.s32.totalorder %s16, 0
      %p114 = por %p112, %p113
      %p115 = scmp.ne.s32.totalorder %s104, %s107
      %p116 = scmp.eq.s32.totalorder %s21, 3
      %p117 = por %p115, %p116
      %p118 = scmp.ne.s32.totalorder %s107, %s108
      %p119 = scmp.eq.s32.totalorder %s21, 0
      %p120 = por %p118, %p119
      %p121 = scmp.ne.s32.totalorder %s107, %s108
      %p122 = scmp.eq.s32.totalorder %s22, 3
      %p123 = por %p121, %p122
      %p125 = scmp.ne.s32.totalorder %s108, %s124
      %p126 = scmp.eq.s32.totalorder %s22, 0
      %p127 = por %p125, %p126
      %p128 = scmp.le.s32.totalorder 1, %s16
      %p129 = scmp.lt.s32.totalorder %s16, 5
      %p130 = pnand %p128, %p129
      %p131 = pneg %p130
      // Predicated region
      $region9: #{tpu_custom_call.1} parent=5 // pred_check
        _
      $region10: #{tpu_custom_call.1} parent=5 // pred_check_branch
        %133 = sbr.rel (%p130) target = $region12
      $region11: #{tpu_custom_call.1} parent=5 // pred_region
        %s134 = ssub.s32 %s16, 1
      $region12: #{tpu_custom_call.1} parent=5 // pred_fallthru
        _
      %p135 = scmp.lt.s32.totalorder %s16, 4
      // Predicated region
      $region13: #{tpu_custom_call.1} parent=5 // pred_check
        %p136 = pneg %p135
      $region14: #{tpu_custom_call.1} parent=5 // pred_check_branch
        %138 = sbr.rel (%p136) target = $region16
      $region15: #{tpu_custom_call.1} parent=5 // pred_region
        // Predicated region
        $region17: #{tpu_custom_call.1} parent=15 // pred_check
          %p139 = pneg %p36
        $region18: #{tpu_custom_call.1} parent=15 // pred_check_branch
          %141 = sbr.rel (%p139) target = $region20
        $region19: #{tpu_custom_call.1} parent=15 // pred_region
          %s142 = sand.u32 %s26, 1
          %s143 = scalar_lea.sflag [#allocation3], %s142
          %s144 = sand.u32 %s26, 1
          %s145 = smul.addr %s144, 64
          %s146 = scalar_lea.vmem [#allocation2], %s145
          %s147 = smul.u32 8, %s16
          %s149 = ssub.s32 1024, 1024
          %150 = vsyncadd %s143, %s149
          %s151 = smul.addr %s147, 128
          %s152 = scalar_lea.hbm %s0, %s151
          %s153 = sshll.u32 %s146, 4
          %s154 = int_to_ptr.vmem [resolvable:$true] %s153
          %159 = dma.hbm_to_vmem [thread:$0]  %s152, 1024, %s154, %s143, 128, 128, 8
        $region20: #{tpu_custom_call.1} parent=15 // pred_fallthru
          _
        // Predicated region
        $region21: #{tpu_custom_call.1} parent=15 // pred_check
          %p160 = pneg %p62
        $region22: #{tpu_custom_call.1} parent=15 // pred_check_branch
          %162 = sbr.rel (%p160) target = $region24
        $region23: #{tpu_custom_call.1} parent=15 // pred_region
          %s163 = sand.u32 %s52, 1
          %s164 = scalar_lea.sflag [#allocation5], %s163
          %s165 = sand.u32 %s52, 1
          %s166 = smul.addr %s165, 64
          %s167 = scalar_lea.vmem [#allocation4], %s166
          %s168 = smul.u32 8, %s16
          %s170 = ssub.s32 1024, 1024
          %171 = vsyncadd %s164, %s170
          %s172 = smul.addr %s168, 128
          %s173 = scalar_lea.hbm %s1, %s172
          %s174 = sshll.u32 %s167, 4
          %s175 = int_to_ptr.vmem [resolvable:$true] %s174
          %180 = dma.hbm_to_vmem [thread:$0]  %s173, 1024, %s175, %s164, 128, 128, 8
        $region24: #{tpu_custom_call.1} parent=15 // pred_fallthru
          _
      $region16: #{tpu_custom_call.1} parent=5 // pred_fallthru
        _
      %p181 = scmp.le.s32.totalorder 1, %s16
      %p182 = scmp.lt.s32.totalorder %s16, 5
      %p183 = pnand %p181, %p182
      %p184 = pneg %p183
      // Predicated region
      $region25: #{tpu_custom_call.1} parent=5 // pred_check
        _
      $region26: #{tpu_custom_call.1} parent=5 // pred_check_branch
        %186 = sbr.rel (%p183) target = $region28
      $region27: #{tpu_custom_call.1} parent=5 // pred_region
        %s187 = ssub.s32 %s16, 1
        %s188 = sand.u32 %s29, 1
        %s189 = scalar_lea.sflag [#allocation3], %s188
        %s190 = sand.u32 %s29, 1
        %s191 = smul.addr %s190, 64
        %s192 = scalar_lea.vmem [#allocation2], %s191
        // Predicated region
        $region29: #{tpu_custom_call.1} parent=27 // pred_check
          %p193 = pneg %p42
        $region30: #{tpu_custom_call.1} parent=27 // pred_check_branch
          %195 = sbr.rel (%p193) target = $region32
        $region31: #{tpu_custom_call.1} parent=27 // pred_region
          %196 = dma.done %s189, 1024
        $region32: #{tpu_custom_call.1} parent=27 // pred_fallthru
          _
        %s197 = sand.u32 %s55, 1
        %s198 = scalar_lea.sflag [#allocation5], %s197
        %s199 = sand.u32 %s55, 1
        %s200 = smul.addr %s199, 64
        %s201 = scalar_lea.vmem [#allocation4], %s200
        // Predicated region
        $region33: #{tpu_custom_call.1} parent=27 // pred_check
          %p202 = pneg %p68
        $region34: #{tpu_custom_call.1} parent=27 // pred_check_branch
          %204 = sbr.rel (%p202) target = $region36
        $region35: #{tpu_custom_call.1} parent=27 // pred_region
          %205 = dma.done %s198, 1024
        $region36: #{tpu_custom_call.1} parent=27 // pred_fallthru
          _
        %s206 = sand.u32 %s29, 1
        %s207 = scalar_lea.sflag [#allocation3], %s206
        %s208 = sand.u32 %s29, 1
        %s209 = smul.addr %s208, 64
        %s210 = scalar_lea.vmem [#allocation2], %s209
        %p211 = pneg %p42
        %p212 = pneg %p39
        %s213 = sand.u32 %s55, 1
        %s214 = scalar_lea.sflag [#allocation5], %s213
        %s215 = sand.u32 %s55, 1
        %s216 = smul.addr %s215, 64
        %s217 = scalar_lea.vmem [#allocation4], %s216
        %p218 = pneg %p68
        %p219 = pneg %p65
        %p220 = pneg %p94
        %p221 = pneg %p91
        %p222 = scmp.lt.s32.totalorder %s21, 3
        %s223 = scalar_select %p222, %s21, 3
        %s224 = smul.addr %s223, 8
        %s225 = scalar_lea.vmem %s2, %s224
        %p226 = pneg %p120
        %p227 = pneg %p117
        %p228 = scmp.lt.s32.totalorder %s21, 3
        %s229 = scalar_select %p228, %s21, 3
        %s230 = smul.addr %s229, 8
        %s231 = scalar_lea.vmem %s3, %s230
        %s232 = smul.u32 8, %s21
        %s233 = smul.u32 8, %s21
        %p234 = scmp.lt.s32.totalorder %s21, 3
        %s235 = scalar_select %p234, %s21, 3
        %s236 = smul.addr %s235, 8
        %s237 = scalar_lea.vmem %s2, %s236
        %p238 = scmp.lt.s32.totalorder %s21, 3
        %s239 = scalar_select %p238, %s21, 3
        %s240 = smul.addr %s239, 8
        %s241 = scalar_lea.vmem %s3, %s240
        %v242 = vld [vmem:[%s192] sm:$0xff]
        %v243 = vld [vmem:[%s192 + $0x8] sm:$0xff]
        %v244 = vld [vmem:[%s192 + $0x10] sm:$0xff]
        %v245 = vld [vmem:[%s192 + $0x18] sm:$0xff]
        %v246 = vld [vmem:[%s192 + $0x20] sm:$0xff]
        %v247 = vld [vmem:[%s192 + $0x28] sm:$0xff]
        %v248 = vld [vmem:[%s192 + $0x30] sm:$0xff]
        %v249 = vld [vmem:[%s192 + $0x38] sm:$0xff]
        %v250 = vld [vmem:[%s201] sm:$0xff]
        %v251 = vld [vmem:[%s201 + $0x8] sm:$0xff]
        %v252 = vld [vmem:[%s201 + $0x10] sm:$0xff]
        %v253 = vld [vmem:[%s201 + $0x18] sm:$0xff]
        %v254 = vld [vmem:[%s201 + $0x20] sm:$0xff]
        %v255 = vld [vmem:[%s201 + $0x28] sm:$0xff]
        %v256 = vld [vmem:[%s201 + $0x30] sm:$0xff]
        %v257 = vld [vmem:[%s201 + $0x38] sm:$0xff]
        %v258 = vadd.f32 %v242, %v250
        %v259 = vadd.f32 %v243, %v251
        %v260 = vadd.f32 %v244, %v252
        %v261 = vadd.f32 %v245, %v253
        %v262 = vadd.f32 %v246, %v254
        %v263 = vadd.f32 %v247, %v255
        %v264 = vadd.f32 %v248, %v256
        %v265 = vadd.f32 %v249, %v257
        %266 = vmax.xlane.f32.xlu0 %v258
        %v267 = vpop.xlane.xlu0 %266
        %268 = vmax.xlane.f32.xlu0 %v259
        %v269 = vpop.xlane.xlu0 %268
        %270 = vmax.xlane.f32.xlu0 %v260
        %v271 = vpop.xlane.xlu0 %270
        %272 = vmax.xlane.f32.xlu0 %v261
        %v273 = vpop.xlane.xlu0 %272
        %274 = vmax.xlane.f32.xlu0 %v262
        %v275 = vpop.xlane.xlu0 %274
        %276 = vmax.xlane.f32.xlu0 %v263
        %v277 = vpop.xlane.xlu0 %276
        %278 = vmax.xlane.f32.xlu0 %v264
        %v279 = vpop.xlane.xlu0 %278
        %280 = vmax.xlane.f32.xlu0 %v265
        %v281 = vpop.xlane.xlu0 %280
        %vm282 = vcmp.ge.f32.partialorder %v258, %v267
        %vm283 = vcmp.ge.f32.partialorder %v259, %v269
        %vm284 = vcmp.ge.f32.partialorder %v260, %v271
        %vm285 = vcmp.ge.f32.partialorder %v261, %v273
        %vm286 = vcmp.ge.f32.partialorder %v262, %v275
        %vm287 = vcmp.ge.f32.partialorder %v263, %v277
        %vm288 = vcmp.ge.f32.partialorder %v264, %v279
        %vm289 = vcmp.ge.f32.partialorder %v265, %v281
        %v290 = vlaneseq
        %v291 = vand.u32 %v290, 127
        %v292 = vsel %vm282, %v291, 128
        %v293 = vsel %vm283, %v291, 128
        %v294 = vsel %vm284, %v291, 128
        %v295 = vsel %vm285, %v291, 128
        %v296 = vsel %vm286, %v291, 128
        %v297 = vsel %vm287, %v291, 128
        %v298 = vsel %vm288, %v291, 128
        %v299 = vsel %vm289, %v291, 128
        %v300 = vand.u32 %v292, 65535
        %v301 = vshra.s32 %v292, 16
        %v302 = vcvt.s32.f32 %v300
        %v303 = vcvt.s32.f32 %v301
        %304 = vmin.xlane.f32.xlu0 %v303
        %v305 = vpop.xlane.xlu0 %304
        %vm306 = vcmp.eq.f32.partialorder %v303, %v305
        %v307 = vsel %vm306, %v302, inf
        %308 = vmin.xlane.f32.xlu0 %v307
        %v309 = vpop.xlane.xlu0 %308
        %v310 = vcvt.f32.s32 %v309
        %v311 = vcvt.f32.s32 %v305
        %v312 = vshll.u32 %v311, 16
        %v313 = vadd.s32 %v312, %v310
        %v314 = vand.u32 %v293, 65535
        %v315 = vshra.s32 %v293, 16
        %v316 = vcvt.s32.f32 %v314
        %v317 = vcvt.s32.f32 %v315
        %318 = vmin.xlane.f32.xlu0 %v317
        %v319 = vpop.xlane.xlu0 %318
        %vm320 = vcmp.eq.f32.partialorder %v317, %v319
        %v321 = vsel %vm320, %v316, inf
        %322 = vmin.xlane.f32.xlu0 %v321
        %v323 = vpop.xlane.xlu0 %322
        %v324 = vcvt.f32.s32 %v323
        %v325 = vcvt.f32.s32 %v319
        %v326 = vshll.u32 %v325, 16
        %v327 = vadd.s32 %v326, %v324
        %v328 = vand.u32 %v294, 65535
        %v329 = vshra.s32 %v294, 16
        %v330 = vcvt.s32.f32 %v328
        %v331 = vcvt.s32.f32 %v329
        %332 = vmin.xlane.f32.xlu0 %v331
        %v333 = vpop.xlane.xlu0 %332
        %vm334 = vcmp.eq.f32.partialorder %v331, %v333
        %v335 = vsel %vm334, %v330, inf
        %336 = vmin.xlane.f32.xlu0 %v335
        %v337 = vpop.xlane.xlu0 %336
        %v338 = vcvt.f32.s32 %v337
        %v339 = vcvt.f32.s32 %v333
        %v340 = vshll.u32 %v339, 16
        %v341 = vadd.s32 %v340, %v338
        %v342 = vand.u32 %v295, 65535
        %v343 = vshra.s32 %v295, 16
        %v344 = vcvt.s32.f32 %v342
        %v345 = vcvt.s32.f32 %v343
        %346 = vmin.xlane.f32.xlu0 %v345
        %v347 = vpop.xlane.xlu0 %346
        %vm348 = vcmp.eq.f32.partialorder %v345, %v347
        %v349 = vsel %vm348, %v344, inf
        %350 = vmin.xlane.f32.xlu0 %v349
        %v351 = vpop.xlane.xlu0 %350
        %v352 = vcvt.f32.s32 %v351
        %v353 = vcvt.f32.s32 %v347
        %v354 = vshll.u32 %v353, 16
        %v355 = vadd.s32 %v354, %v352
        %v356 = vand.u32 %v296, 65535
        %v357 = vshra.s32 %v296, 16
        %v358 = vcvt.s32.f32 %v356
        %v359 = vcvt.s32.f32 %v357
        %360 = vmin.xlane.f32.xlu0 %v359
        %v361 = vpop.xlane.xlu0 %360
        %vm362 = vcmp.eq.f32.partialorder %v359, %v361
        %v363 = vsel %vm362, %v358, inf
        %364 = vmin.xlane.f32.xlu0 %v363
        %v365 = vpop.xlane.xlu0 %364
        %v366 = vcvt.f32.s32 %v365
        %v367 = vcvt.f32.s32 %v361
        %v368 = vshll.u32 %v367, 16
        %v369 = vadd.s32 %v368, %v366
        %v370 = vand.u32 %v297, 65535
        %v371 = vshra.s32 %v297, 16
        %v372 = vcvt.s32.f32 %v370
        %v373 = vcvt.s32.f32 %v371
        %374 = vmin.xlane.f32.xlu0 %v373
        %v375 = vpop.xlane.xlu0 %374
        %vm376 = vcmp.eq.f32.partialorder %v373, %v375
        %v377 = vsel %vm376, %v372, inf
        %378 = vmin.xlane.f32.xlu0 %v377
        %v379 = vpop.xlane.xlu0 %378
        %v380 = vcvt.f32.s32 %v379
        %v381 = vcvt.f32.s32 %v375
        %v382 = vshll.u32 %v381, 16
        %v383 = vadd.s32 %v382, %v380
        %v384 = vand.u32 %v298, 65535
        %v385 = vshra.s32 %v298, 16
        %v386 = vcvt.s32.f32 %v384
        %v387 = vcvt.s32.f32 %v385
        %388 = vmin.xlane.f32.xlu0 %v387
        %v389 = vpop.xlane.xlu0 %388
        %vm390 = vcmp.eq.f32.partialorder %v387, %v389
        %v391 = vsel %vm390, %v386, inf
        %392 = vmin.xlane.f32.xlu0 %v391
        %v393 = vpop.xlane.xlu0 %392
        %v394 = vcvt.f32.s32 %v393
        %v395 = vcvt.f32.s32 %v389
        %v396 = vshll.u32 %v395, 16
        %v397 = vadd.s32 %v396, %v394
        %v398 = vand.u32 %v299, 65535
        %v399 = vshra.s32 %v299, 16
        %v400 = vcvt.s32.f32 %v398
        %v401 = vcvt.s32.f32 %v399
        %402 = vmin.xlane.f32.xlu0 %v401
        %v403 = vpop.xlane.xlu0 %402
        %vm404 = vcmp.eq.f32.partialorder %v401, %v403
        %v405 = vsel %vm404, %v400, inf
        %406 = vmin.xlane.f32.xlu0 %v405
        %v407 = vpop.xlane.xlu0 %406
        %v408 = vcvt.f32.s32 %v407
        %v409 = vcvt.f32.s32 %v403
        %v410 = vshll.u32 %v409, 16
        %v411 = vadd.s32 %v410, %v408
        %v412 = vsel %vm282, %v242, -inf
        %v413 = vsel %vm283, %v243, -inf
        %v414 = vsel %vm284, %v244, -inf
        %v415 = vsel %vm285, %v245, -inf
        %v416 = vsel %vm286, %v246, -inf
        %v417 = vsel %vm287, %v247, -inf
        %v418 = vsel %vm288, %v248, -inf
        %v419 = vsel %vm289, %v249, -inf
        %420 = vmax.xlane.f32.xlu0 %v412
        %v421 = vpop.xlane.xlu0 %420
        %422 = vmax.xlane.f32.xlu0 %v413
        %v423 = vpop.xlane.xlu0 %422
        %424 = vmax.xlane.f32.xlu0 %v414
        %v425 = vpop.xlane.xlu0 %424
        %426 = vmax.xlane.f32.xlu0 %v415
        %v427 = vpop.xlane.xlu0 %426
        %428 = vmax.xlane.f32.xlu0 %v416
        %v429 = vpop.xlane.xlu0 %428
        %430 = vmax.xlane.f32.xlu0 %v417
        %v431 = vpop.xlane.xlu0 %430
        %432 = vmax.xlane.f32.xlu0 %v418
        %v433 = vpop.xlane.xlu0 %432
        %434 = vmax.xlane.f32.xlu0 %v419
        %v435 = vpop.xlane.xlu0 %434
        %436 = vmax.xlane.f32.xlu0 %v242
        %v437 = vpop.xlane.xlu0 %436
        %438 = vmax.xlane.f32.xlu0 %v243
        %v439 = vpop.xlane.xlu0 %438
        %440 = vmax.xlane.f32.xlu0 %v244
        %v441 = vpop.xlane.xlu0 %440
        %442 = vmax.xlane.f32.xlu0 %v245
        %v443 = vpop.xlane.xlu0 %442
        %444 = vmax.xlane.f32.xlu0 %v246
        %v445 = vpop.xlane.xlu0 %444
        %446 = vmax.xlane.f32.xlu0 %v247
        %v447 = vpop.xlane.xlu0 %446
        %448 = vmax.xlane.f32.xlu0 %v248
        %v449 = vpop.xlane.xlu0 %448
        %450 = vmax.xlane.f32.xlu0 %v249
        %v451 = vpop.xlane.xlu0 %450
        %v452 = vsub.f32 %v242, %v437
        %v453 = vsub.f32 %v243, %v439
        %v454 = vsub.f32 %v244, %v441
        %v455 = vsub.f32 %v245, %v443
        %v456 = vsub.f32 %v246, %v445
        %v457 = vsub.f32 %v247, %v447
        %v458 = vsub.f32 %v248, %v449
        %v459 = vsub.f32 %v249, %v451
        %v460 = vmul.f32 %v452, 1.442695
        %v461 = vpow.pop %v460
        %v462 = vmul.f32 %v453, 1.442695
        %v463 = vpow.pop %v462
        %v464 = vmul.f32 %v454, 1.442695
        %v465 = vpow.pop %v464
        %v466 = vmul.f32 %v455, 1.442695
        %v467 = vpow.pop %v466
        %v468 = vmul.f32 %v456, 1.442695
        %v469 = vpow.pop %v468
        %v470 = vmul.f32 %v457, 1.442695
        %v471 = vpow.pop %v470
        %v472 = vmul.f32 %v458, 1.442695
        %v473 = vpow.pop %v472
        %v474 = vmul.f32 %v459, 1.442695
        %v475 = vpow.pop %v474
        %476 = vadd.xlane.f32.xlu0 %v461
        %v477 = vpop.xlane.xlu0 %476
        %478 = vadd.xlane.f32.xlu0 %v463
        %v479 = vpop.xlane.xlu0 %478
        %480 = vadd.xlane.f32.xlu0 %v465
        %v481 = vpop.xlane.xlu0 %480
        %482 = vadd.xlane.f32.xlu0 %v467
        %v483 = vpop.xlane.xlu0 %482
        %484 = vadd.xlane.f32.xlu0 %v469
        %v485 = vpop.xlane.xlu0 %484
        %486 = vadd.xlane.f32.xlu0 %v471
        %v487 = vpop.xlane.xlu0 %486
        %488 = vadd.xlane.f32.xlu0 %v473
        %v489 = vpop.xlane.xlu0 %488
        %490 = vadd.xlane.f32.xlu0 %v475
        %v491 = vpop.xlane.xlu0 %490
        %v492 = vlog2.pop %v477
        %v493 = vmul.f32 %v492, 0.6931472
        %v494 = vlog2.pop %v479
        %v495 = vmul.f32 %v494, 0.6931472
        %v496 = vlog2.pop %v481
        %v497 = vmul.f32 %v496, 0.6931472
        %v498 = vlog2.pop %v483
        %v499 = vmul.f32 %v498, 0.6931472
        %v500 = vlog2.pop %v485
        %v501 = vmul.f32 %v500, 0.6931472
        %v502 = vlog2.pop %v487
        %v503 = vmul.f32 %v502, 0.6931472
        %v504 = vlog2.pop %v489
        %v505 = vmul.f32 %v504, 0.6931472
        %v506 = vlog2.pop %v491
        %v507 = vmul.f32 %v506, 0.6931472
        %v508 = vadd.f32 %v437, %v493
        %v509 = vadd.f32 %v439, %v495
        %v510 = vadd.f32 %v441, %v497
        %v511 = vadd.f32 %v443, %v499
        %v512 = vadd.f32 %v445, %v501
        %v513 = vadd.f32 %v447, %v503
        %v514 = vadd.f32 %v449, %v505
        %v515 = vadd.f32 %v451, %v507
        %v516 = vsub.f32 %v421, %v508
        %v517 = vsub.f32 %v423, %v509
        %v518 = vsub.f32 %v425, %v510
        %v519 = vsub.f32 %v427, %v511
        %v520 = vsub.f32 %v429, %v512
        %v521 = vsub.f32 %v431, %v513
        %v522 = vsub.f32 %v433, %v514
        %v523 = vsub.f32 %v435, %v515
        %v524 = vlaneseq
        %v525 = vshrl.u32 %v524, 7
        %v526 = vsub.s32 %v291, %v525
        %v527 = vrot.slane %v313, %v526
        %v528 = vlaneseq
        %v529 = vshrl.u32 %v528, 7
        %v530 = vsub.s32 %v291, %v529
        %v531 = vrot.slane %v327, %v530
        %v532 = vlaneseq
        %v533 = vshrl.u32 %v532, 7
        %v534 = vsub.s32 %v291, %v533
        %v535 = vrot.slane %v341, %v534
        %v536 = vlaneseq
        %v537 = vshrl.u32 %v536, 7
        %v538 = vsub.s32 %v291, %v537
        %v539 = vrot.slane %v355, %v538
        %v540 = vlaneseq
        %v541 = vshrl.u32 %v540, 7
        %v542 = vsub.s32 %v291, %v541
        %v543 = vrot.slane %v369, %v542
        %v544 = vlaneseq
        %v545 = vshrl.u32 %v544, 7
        %v546 = vsub.s32 %v291, %v545
        %v547 = vrot.slane %v383, %v546
        %v548 = vlaneseq
        %v549 = vshrl.u32 %v548, 7
        %v550 = vsub.s32 %v291, %v549
        %v551 = vrot.slane %v397, %v550
        %v552 = vlaneseq
        %v553 = vshrl.u32 %v552, 7
        %v554 = vsub.s32 %v291, %v553
        %v555 = vrot.slane %v411, %v554
        %vm556 = vcmask 1041409
        %v557 = vsel %vm556, %v531, %v527
        %vm558 = vcmask 1042434
        %v559 = vsel %vm558, %v535, %v557
        %vm560 = vcmask 1043459
        %v561 = vsel %vm560, %v539, %v559
        %vm562 = vcmask 1044484
        %v563 = vsel %vm562, %v543, %v561
        %vm564 = vcmask 1045509
        %v565 = vsel %vm564, %v547, %v563
        %vm566 = vcmask 1046534
        %v567 = vsel %vm566, %v551, %v565
        %vm568 = vcmask 1047559
        %v569 = vsel %vm568, %v555, %v567
        %vm570 = vcmask 64512
        %571 = vst.msk [vmem:[%s237] sm:$0xff] %vm570, %v569
        %v580 = vlaneseq
        %v581 = vshrl.u32 %v580, 7
        %v582 = vsub.s32 %v291, %v581
        %v583 = vrot.slane %v516, %v582
        %v584 = vlaneseq
        %v585 = vshrl.u32 %v584, 7
        %v586 = vsub.s32 %v291, %v585
        %v587 = vrot.slane %v517, %v586
        %v588 = vlaneseq
        %v589 = vshrl.u32 %v588, 7
        %v590 = vsub.s32 %v291, %v589
        %v591 = vrot.slane %v518, %v590
        %v592 = vlaneseq
        %v593 = vshrl.u32 %v592, 7
        %v594 = vsub.s32 %v291, %v593
        %v595 = vrot.slane %v519, %v594
        %v596 = vlaneseq
        %v597 = vshrl.u32 %v596, 7
        %v598 = vsub.s32 %v291, %v597
        %v599 = vrot.slane %v520, %v598
        %v600 = vlaneseq
        %v601 = vshrl.u32 %v600, 7
        %v602 = vsub.s32 %v291, %v601
        %v603 = vrot.slane %v521, %v602
        %v604 = vlaneseq
        %v605 = vshrl.u32 %v604, 7
        %v606 = vsub.s32 %v291, %v605
        %v607 = vrot.slane %v522, %v606
        %v608 = vlaneseq
        %v609 = vshrl.u32 %v608, 7
        %v610 = vsub.s32 %v291, %v609
        %v611 = vrot.slane %v523, %v610
        %v612 = vsel %vm556, %v587, %v583
        %v613 = vsel %vm558, %v591, %v612
        %v614 = vsel %vm560, %v595, %v613
        %v615 = vsel %vm562, %v599, %v614
        %v616 = vsel %vm564, %v603, %v615
        %v617 = vsel %vm566, %v607, %v616
        %v618 = vsel %vm568, %v611, %v617
        %v620 = vsel %vm570, %v618, 0.0
        %621 = vadd.xlane.f32.xlu0 %v620
        %v622 = vpop.xlane.xlu0 %621
        %v623 = vsub.f32 0.0, %v622
        %vm624 = vcmask 7168
        %625 = vst.msk [vmem:[%s241] sm:$0xff] %vm624, %v623
        %p626 = scmp.lt.s32.totalorder %s21, 3
        %s627 = scalar_select %p626, %s21, 3
        %s628 = smul.addr %s627, 8
        %s629 = scalar_lea.vmem %s2, %s628
        %p630 = scmp.lt.s32.totalorder %s21, 3
        %s631 = scalar_select %p630, %s21, 3
        %s632 = smul.addr %s631, 8
        %s633 = scalar_lea.vmem %s3, %s632
        // Predicated region
        $region37: #{tpu_custom_call.1} parent=27 // pred_check
          %p634 = pneg %p91
        $region38: #{tpu_custom_call.1} parent=27 // pred_check_branch
          %636 = sbr.rel (%p634) target = $region40
        $region39: #{tpu_custom_call.1} parent=27 // pred_region
          _
        $region40: #{tpu_custom_call.1} parent=27 // pred_fallthru
          _
        // Predicated region
        $region41: #{tpu_custom_call.1} parent=27 // pred_check
          %p637 = pneg %p117
        $region42: #{tpu_custom_call.1} parent=27 // pred_check_branch
          %639 = sbr.rel (%p637) target = $region44
        $region43: #{tpu_custom_call.1} parent=27 // pred_region
          _
        $region44: #{tpu_custom_call.1} parent=27 // pred_fallthru
          _
      $region28: #{tpu_custom_call.1} parent=5 // pred_fallthru
        _
      %p640 = scmp.le.s32.totalorder 2, %s16
      // Predicated region
      $region45: #{tpu_custom_call.1} parent=5 // pred_check
        %p641 = pneg %p640
      $region46: #{tpu_custom_call.1} parent=5 // pred_check_branch
        %643 = sbr.rel (%p641) target = $region48
      $region47: #{tpu_custom_call.1} parent=5 // pred_region
        %s644 = ssub.s32 %s16, 2
        // Predicated region
        $region49: #{tpu_custom_call.1} parent=47 // pred_check
          %p645 = pneg %p97
        $region50: #{tpu_custom_call.1} parent=47 // pred_check_branch
          %647 = sbr.rel (%p645) target = $region52
        $region51: #{tpu_custom_call.1} parent=47 // pred_region
          %p648 = scmp.lt.s32.totalorder %s22, 3
          %s649 = scalar_select %p648, %s22, 3
          %s650 = smul.addr %s649, 8
          %s651 = scalar_lea.vmem %s2, %s650
        $region52: #{tpu_custom_call.1} parent=47 // pred_fallthru
          _
        // Predicated region
        $region53: #{tpu_custom_call.1} parent=47 // pred_check
          %p652 = pneg %p123
        $region54: #{tpu_custom_call.1} parent=47 // pred_check_branch
          %654 = sbr.rel (%p652) target = $region56
        $region55: #{tpu_custom_call.1} parent=47 // pred_region
          %p655 = scmp.lt.s32.totalorder %s22, 3
          %s656 = scalar_select %p655, %s22, 3
          %s657 = smul.addr %s656, 8
          %s658 = scalar_lea.vmem %s3, %s657
        $region56: #{tpu_custom_call.1} parent=47 // pred_fallthru
          _
      $region48: #{tpu_custom_call.1} parent=5 // pred_fallthru
        _
    $region6: #{tpu_custom_call.1} parent=1 // loop_footer
      %s20 = sadd.s32 1, %s16
    $region7: #{tpu_custom_call.1} parent=1 // loop_footer_branch
      %15 = sbr.rel target = $region3
    $region8: #{tpu_custom_call.1} parent=1 // loop_exit
      _
    %659 = vsyncpa [#allocation3], 1
    %s660 = scalar_lea.sflag [#allocation3], 1
    %661 = vsyncpa %s660, 1
    %662 = vsyncpa [#allocation5], 1
    %s663 = scalar_lea.sflag [#allocation5], 1
    %664 = vsyncpa %s663, 1

</llo_original>
